<compile_context>
chip_gen: v7x
topology: tpu7x:2x2x1
jax: 0.10.0
libtpu: 0.0.40
codegen_flags: <defaults>
</compile_context>

<pallas_src>
import jax
import jax.numpy as jnp
from jax import lax
from jax.experimental import pallas as pl
from jax.experimental.pallas import tpu as pltpu


def _round_up(x, m):
    return -(-x // m) * m


def _round_down(x, m):
    return (x // m) * m


def _coattn_kernel(a_ref, b_ref, a_out_ref, b_out_ref):
    # a_ref: (TB, L_A, D), b_ref: (TB, L_B, D) VMEM tiles in their native dtype.
    A = a_ref[...]
    B = b_ref[...]
    L_A = A.shape[1]
    L_B = B.shape[1]

    # S[b, i, j] = <A[b, i, :], B[b, j, :]>
    # One batched MXU matmul (f32 accumulation) feeds BOTH attention directions;
    # no explicit transposes anywhere.
    S = lax.dot_general(
        A, B,
        dimension_numbers=(((2,), (2,)), ((0,), (0,))),
        preferred_element_type=jnp.float32,
    )                                                        # (TB, L_A, L_B) f32

    # ---- A -> B : row softmax over axis 2 (lane axis) ----
    e_ab = jnp.exp(S - jnp.max(S, axis=2, keepdims=True))
    inv_ab = pl.reciprocal(jnp.sum(e_ab, axis=2, keepdims=True), approx=False)
    attn_ab = e_ab * inv_ab                                  # softmax(S, axis=-1)
    # mean_i(attn_ab_i @ B) == ((1/L_A) * column-sum attn_ab) @ B
    w_a = jnp.sum(attn_ab, axis=1, keepdims=True) * (1.0 / L_A)   # (TB, 1, L_B)
    a_out = lax.dot_general(
        w_a.astype(B.dtype), B,
        dimension_numbers=(((2,), (1,)), ((0,), (0,))),
        preferred_element_type=jnp.float32,
    )                                                        # (TB, 1, D)
    a_out_ref[...] = a_out[:, 0, :].astype(a_out_ref.dtype)

    # ---- B -> A : column softmax over axis 1 (sublane axis) of the SAME S ----
    # softmax(S^T, axis=-1)[b, j, i] == colsoftmax(S, axis=1)[b, i, j]
    e_ba = jnp.exp(S - jnp.max(S, axis=1, keepdims=True))
    inv_ba = pl.reciprocal(jnp.sum(e_ba, axis=1, keepdims=True), approx=False)
    attn_ba = e_ba * inv_ba                                  # (TB, L_A, L_B)
    # mean_j(attn_B_to_A_j @ A) == sum_i ((1/L_B) * sum_j attn_ba[:, i, j]) * A[:, i, :]
    w_b = jnp.sum(attn_ba, axis=2, keepdims=True) * (1.0 / L_B)   # (TB, L_A, 1)
    # VPU lane-broadcast multiply + sublane reduce; avoids an M=1 transposed
    # matmul on the MXU.  (w_b is f32, so bf16 A promotes to f32 here.)
    b_out = jnp.sum(w_b * A, axis=1)                         # (TB, D) f32
    b_out_ref[...] = b_out.astype(b_out_ref.dtype)


def co_attention(A, B, *, batch_block=None):
    """A: (N, L_A, D), B: (N, L_B, D)  ->  ((N, D), (N, D))"""
    N, L_A, D = A.shape
    NB, L_B, DB = B.shape
    assert NB == N and DB == D

    in_bytes = jnp.dtype(A.dtype).itemsize

    # --- generation-aware VMEM budget (v5e/v6e: 128 MiB, v7x: 64 MiB) ---
    try:
        vmem_phys = int(pltpu.get_tpu_info().vmem_capacity_bytes)
    except Exception:
        vmem_phys = 64 << 20  # conservative fallback: assume v7x-sized VMEM
    block_budget = int(vmem_phys * 0.55)       # for resident blocks + temps
    vmem_limit = int(vmem_phys * 0.75)         # raised scoped-VMEM limit

    # Live VMEM per batch row of a block:
    #   2 inputs x 2 pipeline buffers, ~4 f32 (L_A, L_B) softmax temps,
    #   one f32 (L_A, D) temp for the B->A weighted sum, small outputs.
    per_row = (2 * 2 * (L_A + L_B) * D * in_bytes
               + 4 * L_A * L_B * 4
               + L_A * D * 4
               + 4 * D * 4)

    if N < 8:
        TB = N                                  # full batch dim (tiny problems)
    else:
        tb_vmem = max(8, _round_down(block_budget // max(per_row, 1), 8))
        # Keep >= 2 grid steps so the "parallel" axis can shard across the two
        # TensorCores on v7x.
        tb_half = max(8, _round_up(-(-N // 2), 8))
        TB = min(tb_vmem, tb_half, _round_down(N, 8))
        if batch_block is not None:
            TB = min(TB, max(8, _round_down(int(batch_block), 8)))

    n_steps = pl.cdiv(N, TB)
    # No jnp.pad: the (possibly partial) final block relies on Pallas
    # partial-block handling; garbage tail rows never reach HBM.

    a_out, b_out = pl.pallas_call(
        _coattn_kernel,
        out_shape=(
            jax.ShapeDtypeStruct((N, D), A.dtype),
            jax.ShapeDtypeStruct((N, D), B.dtype),
        ),
        grid_spec=pltpu.PrefetchScalarGridSpec(
            num_scalar_prefetch=0,
            grid=(n_steps,),
            in_specs=[
                pl.BlockSpec((TB, L_A, D), lambda n: (n, 0, 0)),
                pl.BlockSpec((TB, L_B, D), lambda n: (n, 0, 0)),
            ],
            out_specs=(
                pl.BlockSpec((TB, D), lambda n: (n, 0)),
                pl.BlockSpec((TB, D), lambda n: (n, 0)),
            ),
        ),
        compiler_params=pltpu.CompilerParams(
            dimension_semantics=("parallel",),
            vmem_limit_bytes=vmem_limit,
        ),
    )(A, B)

    return a_out, b_out


def _reference(A, B):
    # Pure-JAX reference mirroring the PyTorch forward.
    S = jnp.einsum("nad,nbd->nab", A, B)
    attn_a2b = jax.nn.softmax(S, axis=-1)
    attn_b2a = jax.nn.softmax(jnp.swapaxes(S, 1, 2), axis=-1)
    A_co = jnp.einsum("nab,nbd->nad", attn_a2b, B)
    B_co = jnp.einsum("nba,nad->nbd", attn_b2a, A)
    return jnp.mean(A_co, axis=1), jnp.mean(B_co, axis=1)


if __name__ == "__main__":
    key = jax.random.PRNGKey(0)
    kA, kB = jax.random.split(key)

    N, L_A, L_B, D = 2, 8, 8, 32
    A = jax.random.normal(kA, (N, L_A, D), dtype=jnp.float32)
    B = jax.random.normal(kB, (N, L_B, D), dtype=jnp.float32)

    a_out, b_out = co_attention(A, B)
    jax.block_until_ready((a_out, b_out))

    a_ref, b_ref = _reference(A, B)
    assert a_out.shape == (N, D) and b_out.shape == (N, D)
    assert jnp.allclose(a_out, a_ref, atol=1e-5, rtol=1e-5)
    assert jnp.allclose(b_out, b_ref, atol=1e-5, rtol=1e-5)

    print("KERNEL_OK")
</pallas_src>

<mosaic_0001>
module attributes {stable_mosaic.version = 11 : i64} {
  func.func @_coattn_kernel(%arg0: i32, %arg1: memref<2x8x32xf32, #tpu.memory_space<vmem>>, %arg2: memref<2x8x32xf32, #tpu.memory_space<vmem>>, %arg3: memref<2x32xf32, #tpu.memory_space<vmem>>, %arg4: memref<2x32xf32, #tpu.memory_space<vmem>>) attributes {dimension_semantics = [#tpu.dimension_semantics<parallel>], iteration_bounds = array<i64: 1>, scalar_prefetch = 0 : i64, scratch_operands = 0 : i64, tpu.core_type = #tpu.core_type<tc>, window_params = [{transform_indices = @transform_0, window_bounds = array<i64: 2, 8, 32>}, {transform_indices = @transform_1, window_bounds = array<i64: 2, 8, 32>}, {transform_indices = @transform_2, window_bounds = array<i64: 2, 32>}, {transform_indices = @transform_3, window_bounds = array<i64: 2, 32>}]} {
    %c0 = arith.constant 0 : index
    %c0_0 = arith.constant 0 : index
    %c0_1 = arith.constant 0 : index
    %0 = vector.load %arg1[%c0, %c0_0, %c0_1] : memref<2x8x32xf32, #tpu.memory_space<vmem>>, vector<2x8x32xf32>
    %c0_2 = arith.constant 0 : index
    %c0_3 = arith.constant 0 : index
    %c0_4 = arith.constant 0 : index
    %1 = vector.load %arg2[%c0_2, %c0_3, %c0_4] : memref<2x8x32xf32, #tpu.memory_space<vmem>>, vector<2x8x32xf32>
    %cst = arith.constant dense<0.000000e+00> : vector<2x8x8xf32>
    %2 = tpu.matmul %0, %1, %cst {dimension_numbers = #tpu.dot_dimension_numbers<[2], [2], [1], [1], [0, 0, 0, 1, 1, 1], [0], [0]>} : vector<2x8x32xf32>, vector<2x8x32xf32>, vector<2x8x8xf32> -> vector<2x8x8xf32>
    %cst_5 = arith.constant dense<0xFF800000> : vector<2x8xf32>
    %3 = vector.multi_reduction <maximumf>, %2, %cst_5 [2] : vector<2x8x8xf32> to vector<2x8xf32>
    %4 = vector.shape_cast %3 : vector<2x8xf32> to vector<2x8x1xf32>
    %5 = vector.broadcast %4 : vector<2x8x1xf32> to vector<2x8x8xf32>
    %6 = arith.subf %2, %5 : vector<2x8x8xf32>
    %7 = math.exp %6 : vector<2x8x8xf32>
    %cst_6 = arith.constant dense<0.000000e+00> : vector<2x8xf32>
    %8 = vector.multi_reduction <add>, %7, %cst_6 [2] : vector<2x8x8xf32> to vector<2x8xf32>
    %9 = vector.shape_cast %8 : vector<2x8xf32> to vector<2x8x1xf32>
    %10 = tpu.reciprocal %9 : vector<2x8x1xf32> -> vector<2x8x1xf32>
    %11 = vector.broadcast %10 : vector<2x8x1xf32> to vector<2x8x8xf32>
    %12 = arith.mulf %7, %11 : vector<2x8x8xf32>
    %cst_7 = arith.constant dense<0.000000e+00> : vector<2x8xf32>
    %13 = vector.multi_reduction <add>, %12, %cst_7 [1] : vector<2x8x8xf32> to vector<2x8xf32>
    %14 = vector.shape_cast %13 : vector<2x8xf32> to vector<2x1x8xf32>
    %cst_8 = arith.constant 1.250000e-01 : f32
    %15 = vector.broadcast %cst_8 : f32 to vector<2x1x8xf32>
    %16 = arith.mulf %14, %15 : vector<2x1x8xf32>
    %cst_9 = arith.constant dense<0.000000e+00> : vector<2x1x32xf32>
    %17 = tpu.matmul %16, %1, %cst_9 {dimension_numbers = #tpu.dot_dimension_numbers<[2], [1], [1], [2], [0, 0, 0, 1, 1, 2], [0], [0]>} : vector<2x1x8xf32>, vector<2x8x32xf32>, vector<2x1x32xf32> -> vector<2x1x32xf32>
    %18 = vector.shape_cast %17 : vector<2x1x32xf32> to vector<2x32xf32>
    %c0_10 = arith.constant 0 : index
    %c0_11 = arith.constant 0 : index
    %19 = vector.load %arg3[%c0_10, %c0_11] : memref<2x32xf32, #tpu.memory_space<vmem>>, vector<2x32xf32>
    tpu.vector_store %arg3[%c0_10, %c0_11], %18 {strides = array<i32>} : memref<2x32xf32, #tpu.memory_space<vmem>>, vector<2x32xf32>,
    %cst_12 = arith.constant dense<0xFF800000> : vector<2x8xf32>
    %20 = vector.multi_reduction <maximumf>, %2, %cst_12 [1] : vector<2x8x8xf32> to vector<2x8xf32>
    %21 = vector.shape_cast %20 : vector<2x8xf32> to vector<2x1x8xf32>
    %22 = vector.broadcast %21 : vector<2x1x8xf32> to vector<2x8x8xf32>
    %23 = arith.subf %2, %22 : vector<2x8x8xf32>
    %24 = math.exp %23 : vector<2x8x8xf32>
    %cst_13 = arith.constant dense<0.000000e+00> : vector<2x8xf32>
    %25 = vector.multi_reduction <add>, %24, %cst_13 [1] : vector<2x8x8xf32> to vector<2x8xf32>
    %26 = vector.shape_cast %25 : vector<2x8xf32> to vector<2x1x8xf32>
    %27 = tpu.reciprocal %26 : vector<2x1x8xf32> -> vector<2x1x8xf32>
    %28 = vector.broadcast %27 : vector<2x1x8xf32> to vector<2x8x8xf32>
    %29 = arith.mulf %24, %28 : vector<2x8x8xf32>
    %cst_14 = arith.constant dense<0.000000e+00> : vector<2x8xf32>
    %30 = vector.multi_reduction <add>, %29, %cst_14 [2] : vector<2x8x8xf32> to vector<2x8xf32>
    %31 = vector.shape_cast %30 : vector<2x8xf32> to vector<2x8x1xf32>
    %cst_15 = arith.constant 1.250000e-01 : f32
    %32 = vector.broadcast %cst_15 : f32 to vector<2x8x1xf32>
    %33 = arith.mulf %31, %32 : vector<2x8x1xf32>
    %34 = vector.broadcast %33 : vector<2x8x1xf32> to vector<2x8x32xf32>
    %35 = arith.mulf %34, %0 : vector<2x8x32xf32>
    %cst_16 = arith.constant dense<0.000000e+00> : vector<2x32xf32>
    %36 = vector.multi_reduction <add>, %35, %cst_16 [1] : vector<2x8x32xf32> to vector<2x32xf32>
    %c0_17 = arith.constant 0 : index
    %c0_18 = arith.constant 0 : index
    %37 = vector.load %arg4[%c0_17, %c0_18] : memref<2x32xf32, #tpu.memory_space<vmem>>, vector<2x32xf32>
    tpu.vector_store %arg4[%c0_17, %c0_18], %36 {strides = array<i32>} : memref<2x32xf32, #tpu.memory_space<vmem>>, vector<2x32xf32>,
    return
  }
  func.func @transform_0(%arg0: i32) -> (i32, i32, i32) {
    %c0_i32 = arith.constant 0 : i32
    %c0_i32_0 = arith.constant 0 : i32
    %c0_i32_1 = arith.constant 0 : i32
    return %arg0, %c0_i32, %c0_i32_0 : i32, i32, i32
  }
  func.func @transform_1(%arg0: i32) -> (i32, i32, i32) {
    %c0_i32 = arith.constant 0 : i32
    %c0_i32_0 = arith.constant 0 : i32
    %c0_i32_1 = arith.constant 0 : i32
    return %arg0, %c0_i32, %c0_i32_0 : i32, i32, i32
  }
  func.func @transform_2(%arg0: i32) -> (i32, i32) {
    %c0_i32 = arith.constant 0 : i32
    %c0_i32_0 = arith.constant 0 : i32
    return %arg0, %c0_i32 : i32, i32
  }
  func.func @transform_3(%arg0: i32) -> (i32, i32) {
    %c0_i32 = arith.constant 0 : i32
    %c0_i32_0 = arith.constant 0 : i32
    return %arg0, %c0_i32 : i32, i32
  }
}

</mosaic_0001>

<llo_original>
// kernel: tpu_custom_call.1
$region0: #{tpu_custom_call.1}
  #allocation0 [shape = 'u32[]', space=smem, size = 0x4, offset = 0x4, fixed_abs, tag = 'smem constant byte address 0x4 - core index']
  #allocation1 [shape = 'u32[144,128]{1,0:T(1,128)}', space=vmem, size = 0x12000, scoped, tag = 'internal scratch']
  %s0 = inlined_call_operand.hbm [shape: f32[2,8,32], index: 0, kind: input, shape index: {}]
  %s1 = inlined_call_operand.hbm [shape: f32[2,8,32], index: 1, kind: input, shape index: {}]
  %s2 = inlined_call_operand.hbm [shape: f32[2,32], index: 2, kind: output, shape index: {0}]
  %s3 = inlined_call_operand.hbm [shape: f32[2,32], index: 3, kind: output, shape index: {1}]
  %4 = xla_tuple %s2, %s3
  %s5 = sld [smem:[#allocation0]]
  $region34: #{tpu_custom_call.1} parent=0
    _
  %s7 = ssub.s32 1, %s5
  %s8 = scalar_select 0, %s7, %s5
  $region1: #{tpu_custom_call.1} parent=0
    #allocation2 [shape = 'u8[8192]{0}', space=vmem, size = 0x2000, scoped, tag = 'input window, operand 0, single buffered']
    #allocation3 [shape = 's32[1]{0}', space=sflag, size = 0x4, scoped, tag = 'scoped memory for tpu_custom_call.1']
    #allocation4 [shape = 's32[1]{0}', space=sflag, size = 0x4, scoped, tag = 'scoped memory for tpu_custom_call.1']
    #allocation5 [shape = 'u8[8192]{0}', space=vmem, size = 0x2000, scoped, tag = 'input window, operand 1, single buffered']
    #allocation6 [shape = 's32[1]{0}', space=sflag, size = 0x4, scoped, tag = 'scoped memory for tpu_custom_call.1']
    #allocation7 [shape = 'u8[1024]{0}', space=vmem, size = 0x400, scoped, tag = 'output window, operand 0, single buffered']
    #allocation8 [shape = 'u8[1024]{0}', space=vmem, size = 0x400, scoped, tag = 'output window, operand 1, single buffered']
    #allocation9 [shape = 's32[1]{0}', space=sflag, size = 0x4, scoped, tag = 'scoped memory for tpu_custom_call.1']
    %9 = vsyncpa [#allocation3], 0
    %10 = vsyncpa [#allocation6], 0
    %11 = vsyncpa [#allocation4], 0
    %12 = vsyncpa [#allocation9], 0
    // Predicated region
    $region2: #{tpu_custom_call.1} parent=1 // pred_check
      _
    $region3: #{tpu_custom_call.1} parent=1 // pred_check_branch
      %14 = sbr.rel (0) target = $region5
    $region4: #{tpu_custom_call.1} parent=1 // pred_region
      %s16 = ssub.s32 256, 256
      %17 = vsyncadd [#allocation3], %s16
      %s18 = sshll.u32 [#allocation2], 4
      %s19 = int_to_ptr.vmem [resolvable:$true] %s18
      %24 = dma.hbm_to_vmem [thread:$0]  %s0, 256, %s19, [#allocation3], 128, 128, 8
    $region5: #{tpu_custom_call.1} parent=1 // pred_fallthru
      _
    // Predicated region
    $region6: #{tpu_custom_call.1} parent=1 // pred_check
      _
    $region7: #{tpu_custom_call.1} parent=1 // pred_check_branch
      %26 = sbr.rel (0) target = $region9
    $region8: #{tpu_custom_call.1} parent=1 // pred_region
      %s28 = ssub.s32 256, 256
      %29 = vsyncadd [#allocation6], %s28
      %s30 = sshll.u32 [#allocation5], 4
      %s31 = int_to_ptr.vmem [resolvable:$true] %s30
      %36 = dma.hbm_to_vmem [thread:$0]  %s1, 256, %s31, [#allocation6], 128, 128, 8
    $region9: #{tpu_custom_call.1} parent=1 // pred_fallthru
      _
    // Predicated region
    $region10: #{tpu_custom_call.1} parent=1 // pred_check
      _
    $region11: #{tpu_custom_call.1} parent=1 // pred_check_branch
      %38 = sbr.rel (0) target = $region13
    $region12: #{tpu_custom_call.1} parent=1 // pred_region
      %39 = dma.done [#allocation3], 256
    $region13: #{tpu_custom_call.1} parent=1 // pred_fallthru
      _
    // Predicated region
    $region14: #{tpu_custom_call.1} parent=1 // pred_check
      _
    $region15: #{tpu_custom_call.1} parent=1 // pred_check_branch
      %41 = sbr.rel (0) target = $region17
    $region16: #{tpu_custom_call.1} parent=1 // pred_region
      %42 = dma.done [#allocation6], 256
    $region17: #{tpu_custom_call.1} parent=1 // pred_fallthru
      _
    %v43 = vld [vmem:[#allocation2] sm:$0xff]
    %v44 = vld [vmem:[#allocation2 + $0x8] sm:$0xff]
    %v45 = vld [vmem:[#allocation5] sm:$0xff]
    %v46 = vld [vmem:[#allocation5 + $0x8] sm:$0xff]
    %vm47 = vcmask 261120
    %v49 = vsel %vm47, %v43, 0
    %v52 = vsel %vm47, %v45, 0
    %54 = vmatprep.subr.mxu0 0.0
    %55 = vmatpush1.xpose.msra.mxu0 %v52
    %56 = vmatprep.subr.mxu0 0.0
    %57 = vmatpush1.xpose.msra.mxu0 0.0
    %58 = vmatprep.subr.mxu0 0.0
    %59 = vmatpush1.xpose.msra.mxu0 0.0
    %60 = vmatprep.subr.mxu0 0.0
    %61 = vmatpush1.xpose.msra.mxu0 0.0
    %62 = vmatprep.subr.mxu0 0.0
    %63 = vmatpush1.xpose.msra.mxu0 0.0
    %64 = vmatprep.subr.mxu0 0.0
    %65 = vmatpush1.xpose.msra.mxu0 0.0
    %66 = vmatprep.subr.mxu0 0.0
    %67 = vmatpush1.xpose.msra.mxu0 0.0
    %68 = vmatprep.subr.mxu0 0.0
    %69 = vmatpush1.xpose.msra.mxu0 0.0
    %70 = vmatprep.subr.mxu0 0.0
    %71 = vmatpush1.xpose.msra.mxu0 0.0
    %72 = vmatprep.subr.mxu0 0.0
    %73 = vmatpush1.xpose.msra.mxu0 0.0
    %74 = vmatprep.subr.mxu0 0.0
    %75 = vmatpush1.xpose.msra.mxu0 0.0
    %76 = vmatprep.subr.mxu0 0.0
    %77 = vmatpush1.xpose.msra.mxu0 0.0
    %78 = vmatprep.subr.mxu0 0.0
    %79 = vmatpush1.xpose.msra.mxu0 0.0
    %80 = vmatprep.subr.mxu0 0.0
    %81 = vmatpush1.xpose.msra.mxu0 0.0
    %82 = vmatprep.subr.mxu0 0.0
    %83 = vmatpush1.xpose.msra.mxu0 0.0
    %84 = vmatprep.subr.mxu0 0.0
    %85 = vmatpush1.xpose.msra.mxu0 0.0
    %86 = vmatprep.subr.mxu0 0.0
    %87 = vmatpush1.xpose.msra.mxu0 0.0
    %88 = vmatprep.subr.mxu0 0.0
    %89 = vmatpush1.xpose.msra.mxu0 0.0
    %90 = vmatprep.subr.mxu0 0.0
    %91 = vmatpush1.xpose.msra.mxu0 0.0
    %92 = vmatprep.subr.mxu0 0.0
    %93 = vmatpush1.xpose.msra.mxu0 0.0
    %94 = vmatprep.subr.mxu0 0.0
    %95 = vmatpush1.xpose.msra.mxu0 0.0
    %96 = vmatprep.subr.mxu0 0.0
    %97 = vmatpush1.xpose.msra.mxu0 0.0
    %98 = vmatprep.subr.mxu0 0.0
    %99 = vmatpush1.xpose.msra.mxu0 0.0
    %100 = vmatprep.subr.mxu0 0.0
    %101 = vmatpush1.xpose.msra.mxu0 0.0
    %102 = vmatprep.subr.mxu0 0.0
    %103 = vmatpush1.xpose.msra.mxu0 0.0
    %104 = vmatprep.subr.mxu0 0.0
    %105 = vmatpush1.xpose.msra.mxu0 0.0
    %106 = vmatprep.subr.mxu0 0.0
    %107 = vmatpush1.xpose.msra.mxu0 0.0
    %108 = vmatprep.subr.mxu0 0.0
    %109 = vmatpush1.xpose.msra.mxu0 0.0
    %110 = vmatprep.subr.mxu0 0.0
    %111 = vmatpush1.xpose.msra.mxu0 0.0
    %112 = vmatprep.subr.mxu0 0.0
    %113 = vmatpush1.xpose.msra.mxu0 0.0
    %114 = vmatprep.subr.mxu0 0.0
    %115 = vmatpush1.xpose.msra.mxu0 0.0
    %116 = vmatprep.subr.mxu0 0.0
    %117 = vmatpush1.xpose.msra.mxu0 0.0
    %118 = vmatprep.mubr.f32.mxu0 0.0
    %119 = vmatmul.mubr.f32.gmra.mrb[0].mxu0 %v49
    %v120 = vpop.f32.mrb[0].mxu0
    %v121 = vadd.f32 0.0, %v120
    %v122 = vpop.f32.mrb[0].mxu0
    %123 = vdwg.mxu0
    %v125 = vsel %vm47, %v44, 0
    %v128 = vsel %vm47, %v46, 0
    %130 = vmatprep.subr.mxu0 0.0
    %131 = vmatpush1.xpose.msra.mxu0 %v128
    %132 = vmatprep.subr.mxu0 0.0
    %133 = vmatpush1.xpose.msra.mxu0 0.0
    %134 = vmatprep.subr.mxu0 0.0
    %135 = vmatpush1.xpose.msra.mxu0 0.0
    %136 = vmatprep.subr.mxu0 0.0
    %137 = vmatpush1.xpose.msra.mxu0 0.0
    %138 = vmatprep.subr.mxu0 0.0
    %139 = vmatpush1.xpose.msra.mxu0 0.0
    %140 = vmatprep.subr.mxu0 0.0
    %141 = vmatpush1.xpose.msra.mxu0 0.0
    %142 = vmatprep.subr.mxu0 0.0
    %143 = vmatpush1.xpose.msra.mxu0 0.0
    %144 = vmatprep.subr.mxu0 0.0
    %145 = vmatpush1.xpose.msra.mxu0 0.0
    %146 = vmatprep.subr.mxu0 0.0
    %147 = vmatpush1.xpose.msra.mxu0 0.0
    %148 = vmatprep.subr.mxu0 0.0
    %149 = vmatpush1.xpose.msra.mxu0 0.0
    %150 = vmatprep.subr.mxu0 0.0
    %151 = vmatpush1.xpose.msra.mxu0 0.0
    %152 = vmatprep.subr.mxu0 0.0
    %153 = vmatpush1.xpose.msra.mxu0 0.0
    %154 = vmatprep.subr.mxu0 0.0
    %155 = vmatpush1.xpose.msra.mxu0 0.0
    %156 = vmatprep.subr.mxu0 0.0
    %157 = vmatpush1.xpose.msra.mxu0 0.0
    %158 = vmatprep.subr.mxu0 0.0
    %159 = vmatpush1.xpose.msra.mxu0 0.0
    %160 = vmatprep.subr.mxu0 0.0
    %161 = vmatpush1.xpose.msra.mxu0 0.0
    %162 = vmatprep.subr.mxu0 0.0
    %163 = vmatpush1.xpose.msra.mxu0 0.0
    %164 = vmatprep.subr.mxu0 0.0
    %165 = vmatpush1.xpose.msra.mxu0 0.0
    %166 = vmatprep.subr.mxu0 0.0
    %167 = vmatpush1.xpose.msra.mxu0 0.0
    %168 = vmatprep.subr.mxu0 0.0
    %169 = vmatpush1.xpose.msra.mxu0 0.0
    %170 = vmatprep.subr.mxu0 0.0
    %171 = vmatpush1.xpose.msra.mxu0 0.0
    %172 = vmatprep.subr.mxu0 0.0
    %173 = vmatpush1.xpose.msra.mxu0 0.0
    %174 = vmatprep.subr.mxu0 0.0
    %175 = vmatpush1.xpose.msra.mxu0 0.0
    %176 = vmatprep.subr.mxu0 0.0
    %177 = vmatpush1.xpose.msra.mxu0 0.0
    %178 = vmatprep.subr.mxu0 0.0
    %179 = vmatpush1.xpose.msra.mxu0 0.0
    %180 = vmatprep.subr.mxu0 0.0
    %181 = vmatpush1.xpose.msra.mxu0 0.0
    %182 = vmatprep.subr.mxu0 0.0
    %183 = vmatpush1.xpose.msra.mxu0 0.0
    %184 = vmatprep.subr.mxu0 0.0
    %185 = vmatpush1.xpose.msra.mxu0 0.0
    %186 = vmatprep.subr.mxu0 0.0
    %187 = vmatpush1.xpose.msra.mxu0 0.0
    %188 = vmatprep.subr.mxu0 0.0
    %189 = vmatpush1.xpose.msra.mxu0 0.0
    %190 = vmatprep.subr.mxu0 0.0
    %191 = vmatpush1.xpose.msra.mxu0 0.0
    %192 = vmatprep.subr.mxu0 0.0
    %193 = vmatpush1.xpose.msra.mxu0 0.0
    %194 = vmatprep.mubr.f32.mxu0 0.0
    %195 = vmatmul.mubr.f32.gmra.mrb[0].mxu0 %v125
    %v196 = vpop.f32.mrb[0].mxu0
    %v197 = vadd.f32 0.0, %v196
    %v198 = vpop.f32.mrb[0].mxu0
    %199 = vdwg.mxu0
    %vm200 = vcmask 64512
    %v201 = vsel %vm200, %v121, -inf
    %202 = vmax.xlane.f32.xlu0 %v201
    %v203 = vpop.xlane.xlu0 %202
    %v204 = vsel %vm200, %v197, -inf
    %205 = vmax.xlane.f32.xlu0 %v204
    %v206 = vpop.xlane.xlu0 %205
    %v207 = vsub.f32 %v121, %v203
    %v208 = vsub.f32 %v197, %v206
    %v209 = vmul.f32 %v207, 1.442695
    %v210 = vpow.pop %v209
    %v211 = vmul.f32 %v208, 1.442695
    %v212 = vpow.pop %v211
    %v213 = vsel %vm200, %v210, 0.0
    %214 = vadd.xlane.f32.xlu0 %v213
    %v215 = vpop.xlane.xlu0 %214
    %v216 = vsel %vm200, %v212, 0.0
    %217 = vadd.xlane.f32.xlu0 %v216
    %v218 = vpop.xlane.xlu0 %217
    %v219 = vrcp.pop %v215
    %v220 = vrcp.pop %v218
    %v221 = vmul.f32 %v210, %v219
    %v222 = vmul.f32 %v212, %v220
    %v223 = vsel %vm200, %v221, 0.0
    %v224 = vrot.slane %v223, 4
    %v225 = vadd.f32 %v223, %v224
    %v226 = vrot.slane %v225, 2
    %v227 = vadd.f32 %v225, %v226
    %v228 = vrot.slane %v227, 1
    %v229 = vadd.f32 %v227, %v228
    %v230 = vsel %vm200, %v222, 0.0
    %v231 = vrot.slane %v230, 4
    %v232 = vadd.f32 %v230, %v231
    %v233 = vrot.slane %v232, 2
    %v234 = vadd.f32 %v232, %v233
    %v235 = vrot.slane %v234, 1
    %v236 = vadd.f32 %v234, %v235
    %v237 = vmul.f32 %v229, 0.125
    %v238 = vmul.f32 %v236, 0.125
    %v240 = vsel %vm200, %v237, 0
    %242 = vmatprep.subr.mxu0 0.0
    %243 = vmatpush1.msra.mxu0 %v45
    %244 = vmatprep.subr.mxu0 0.0
    %245 = vmatpush1.msra.mxu0 0.0
    %246 = vmatprep.subr.mxu0 0.0
    %247 = vmatpush1.msra.mxu0 0.0
    %248 = vmatprep.subr.mxu0 0.0
    %249 = vmatpush1.msra.mxu0 0.0
    %250 = vmatprep.subr.mxu0 0.0
    %251 = vmatpush1.msra.mxu0 0.0
    %252 = vmatprep.subr.mxu0 0.0
    %253 = vmatpush1.msra.mxu0 0.0
    %254 = vmatprep.subr.mxu0 0.0
    %255 = vmatpush1.msra.mxu0 0.0
    %256 = vmatprep.subr.mxu0 0.0
    %257 = vmatpush1.msra.mxu0 0.0
    %258 = vmatprep.subr.mxu0 0.0
    %259 = vmatpush1.msra.mxu0 0.0
    %260 = vmatprep.subr.mxu0 0.0
    %261 = vmatpush1.msra.mxu0 0.0
    %262 = vmatprep.subr.mxu0 0.0
    %263 = vmatpush1.msra.mxu0 0.0
    %264 = vmatprep.subr.mxu0 0.0
    %265 = vmatpush1.msra.mxu0 0.0
    %266 = vmatprep.subr.mxu0 0.0
    %267 = vmatpush1.msra.mxu0 0.0
    %268 = vmatprep.subr.mxu0 0.0
    %269 = vmatpush1.msra.mxu0 0.0
    %270 = vmatprep.subr.mxu0 0.0
    %271 = vmatpush1.msra.mxu0 0.0
    %272 = vmatprep.subr.mxu0 0.0
    %273 = vmatpush1.msra.mxu0 0.0
    %274 = vmatprep.subr.mxu0 0.0
    %275 = vmatpush1.msra.mxu0 0.0
    %276 = vmatprep.subr.mxu0 0.0
    %277 = vmatpush1.msra.mxu0 0.0
    %278 = vmatprep.subr.mxu0 0.0
    %279 = vmatpush1.msra.mxu0 0.0
    %280 = vmatprep.subr.mxu0 0.0
    %281 = vmatpush1.msra.mxu0 0.0
    %282 = vmatprep.subr.mxu0 0.0
    %283 = vmatpush1.msra.mxu0 0.0
    %284 = vmatprep.subr.mxu0 0.0
    %285 = vmatpush1.msra.mxu0 0.0
    %286 = vmatprep.subr.mxu0 0.0
    %287 = vmatpush1.msra.mxu0 0.0
    %288 = vmatprep.subr.mxu0 0.0
    %289 = vmatpush1.msra.mxu0 0.0
    %290 = vmatprep.subr.mxu0 0.0
    %291 = vmatpush1.msra.mxu0 0.0
    %292 = vmatprep.subr.mxu0 0.0
    %293 = vmatpush1.msra.mxu0 0.0
    %294 = vmatprep.subr.mxu0 0.0
    %295 = vmatpush1.msra.mxu0 0.0
    %296 = vmatprep.subr.mxu0 0.0
    %297 = vmatpush1.msra.mxu0 0.0
    %298 = vmatprep.subr.mxu0 0.0
    %299 = vmatpush1.msra.mxu0 0.0
    %300 = vmatprep.subr.mxu0 0.0
    %301 = vmatpush1.msra.mxu0 0.0
    %302 = vmatprep.subr.mxu0 0.0
    %303 = vmatpush1.msra.mxu0 0.0
    %304 = vmatprep.subr.mxu0 0.0
    %305 = vmatpush1.msra.mxu0 0.0
    %306 = vmatprep.mubr.f32.mxu0 0.0
    %307 = vmatmul.mubr.f32.gmra.mrb[0].mxu0 %v240
    %v308 = vpop.f32.mrb[0].mxu0
    %v309 = vadd.f32 0.0, %v308
    %v310 = vpop.f32.mrb[0].mxu0
    %311 = vdwg.mxu0
    %v313 = vsel %vm200, %v238, 0
    %315 = vmatprep.subr.mxu0 0.0
    %316 = vmatpush1.msra.mxu0 %v46
    %317 = vmatprep.subr.mxu0 0.0
    %318 = vmatpush1.msra.mxu0 0.0
    %319 = vmatprep.subr.mxu0 0.0
    %320 = vmatpush1.msra.mxu0 0.0
    %321 = vmatprep.subr.mxu0 0.0
    %322 = vmatpush1.msra.mxu0 0.0
    %323 = vmatprep.subr.mxu0 0.0
    %324 = vmatpush1.msra.mxu0 0.0
    %325 = vmatprep.subr.mxu0 0.0
    %326 = vmatpush1.msra.mxu0 0.0
    %327 = vmatprep.subr.mxu0 0.0
    %328 = vmatpush1.msra.mxu0 0.0
    %329 = vmatprep.subr.mxu0 0.0
    %330 = vmatpush1.msra.mxu0 0.0
    %331 = vmatprep.subr.mxu0 0.0
    %332 = vmatpush1.msra.mxu0 0.0
    %333 = vmatprep.subr.mxu0 0.0
    %334 = vmatpush1.msra.mxu0 0.0
    %335 = vmatprep.subr.mxu0 0.0
    %336 = vmatpush1.msra.mxu0 0.0
    %337 = vmatprep.subr.mxu0 0.0
    %338 = vmatpush1.msra.mxu0 0.0
    %339 = vmatprep.subr.mxu0 0.0
    %340 = vmatpush1.msra.mxu0 0.0
    %341 = vmatprep.subr.mxu0 0.0
    %342 = vmatpush1.msra.mxu0 0.0
    %343 = vmatprep.subr.mxu0 0.0
    %344 = vmatpush1.msra.mxu0 0.0
    %345 = vmatprep.subr.mxu0 0.0
    %346 = vmatpush1.msra.mxu0 0.0
    %347 = vmatprep.subr.mxu0 0.0
    %348 = vmatpush1.msra.mxu0 0.0
    %349 = vmatprep.subr.mxu0 0.0
    %350 = vmatpush1.msra.mxu0 0.0
    %351 = vmatprep.subr.mxu0 0.0
    %352 = vmatpush1.msra.mxu0 0.0
    %353 = vmatprep.subr.mxu0 0.0
    %354 = vmatpush1.msra.mxu0 0.0
    %355 = vmatprep.subr.mxu0 0.0
    %356 = vmatpush1.msra.mxu0 0.0
    %357 = vmatprep.subr.mxu0 0.0
    %358 = vmatpush1.msra.mxu0 0.0
    %359 = vmatprep.subr.mxu0 0.0
    %360 = vmatpush1.msra.mxu0 0.0
    %361 = vmatprep.subr.mxu0 0.0
    %362 = vmatpush1.msra.mxu0 0.0
    %363 = vmatprep.subr.mxu0 0.0
    %364 = vmatpush1.msra.mxu0 0.0
    %365 = vmatprep.subr.mxu0 0.0
    %366 = vmatpush1.msra.mxu0 0.0
    %367 = vmatprep.subr.mxu0 0.0
    %368 = vmatpush1.msra.mxu0 0.0
    %369 = vmatprep.subr.mxu0 0.0
    %370 = vmatpush1.msra.mxu0 0.0
    %371 = vmatprep.subr.mxu0 0.0
    %372 = vmatpush1.msra.mxu0 0.0
    %373 = vmatprep.subr.mxu0 0.0
    %374 = vmatpush1.msra.mxu0 0.0
    %375 = vmatprep.subr.mxu0 0.0
    %376 = vmatpush1.msra.mxu0 0.0
    %377 = vmatprep.subr.mxu0 0.0
    %378 = vmatpush1.msra.mxu0 0.0
    %379 = vmatprep.mubr.f32.mxu0 0.0
    %380 = vmatmul.mubr.f32.gmra.mrb[0].mxu0 %v313
    %v381 = vpop.f32.mrb[0].mxu0
    %v382 = vadd.f32 0.0, %v381
    %v383 = vpop.f32.mrb[0].mxu0
    %384 = vdwg.mxu0
    %v387 = vrot.slane %v382, 7
    %vm388 = vcmask 1041409
    %v389 = vsel %vm388, %v387, %v309
    %vm391 = vcmask 254976
    %392 = vst.msk [vmem:[#allocation7] sm:$0x3] %vm391, %v389
    %v393 = vrot.slane %v201, 4
    %v394 = vmax.f32 %v201, %v393
    %v395 = vrot.slane %v394, 2
    %v396 = vmax.f32 %v394, %v395
    %v397 = vrot.slane %v396, 1
    %v398 = vmax.f32 %v396, %v397
    %v399 = vrot.slane %v204, 4
    %v400 = vmax.f32 %v204, %v399
    %v401 = vrot.slane %v400, 2
    %v402 = vmax.f32 %v400, %v401
    %v403 = vrot.slane %v402, 1
    %v404 = vmax.f32 %v402, %v403
    %v405 = vsub.f32 %v121, %v398
    %v406 = vsub.f32 %v197, %v404
    %v407 = vmul.f32 %v405, 1.442695
    %v408 = vpow.pop %v407
    %v409 = vmul.f32 %v406, 1.442695
    %v410 = vpow.pop %v409
    %v411 = vsel %vm200, %v408, 0.0
    %v412 = vrot.slane %v411, 4
    %v413 = vadd.f32 %v411, %v412
    %v414 = vrot.slane %v413, 2
    %v415 = vadd.f32 %v413, %v414
    %v416 = vrot.slane %v415, 1
    %v417 = vadd.f32 %v415, %v416
    %v418 = vsel %vm200, %v410, 0.0
    %v419 = vrot.slane %v418, 4
    %v420 = vadd.f32 %v418, %v419
    %v421 = vrot.slane %v420, 2
    %v422 = vadd.f32 %v420, %v421
    %v423 = vrot.slane %v422, 1
    %v424 = vadd.f32 %v422, %v423
    %v425 = vrcp.pop %v417
    %v426 = vrcp.pop %v424
    %v427 = vmul.f32 %v408, %v425
    %v428 = vmul.f32 %v410, %v426
    %v429 = vsel %vm200, %v427, 0.0
    %430 = vadd.xlane.f32.xlu0 %v429
    %v431 = vpop.xlane.xlu0 %430
    %v432 = vsel %vm200, %v428, 0.0
    %433 = vadd.xlane.f32.xlu0 %v432
    %v434 = vpop.xlane.xlu0 %433
    %v435 = vmul.f32 %v431, 0.125
    %v436 = vmul.f32 %v434, 0.125
    %v437 = vmul.f32 %v435, %v43
    %v438 = vmul.f32 %v436, %v44
    %v439 = vsel %vm47, %v437, 0.0
    %v440 = vrot.slane %v439, 4
    %v441 = vadd.f32 %v439, %v440
    %v442 = vrot.slane %v441, 2
    %v443 = vadd.f32 %v441, %v442
    %v444 = vrot.slane %v443, 1
    %v445 = vadd.f32 %v443, %v444
    %v446 = vsel %vm47, %v438, 0.0
    %v447 = vrot.slane %v446, 4
    %v448 = vadd.f32 %v446, %v447
    %v449 = vrot.slane %v448, 2
    %v450 = vadd.f32 %v448, %v449
    %v451 = vrot.slane %v450, 1
    %v452 = vadd.f32 %v450, %v451
    %v455 = vsel %vm388, %v452, %v445
    %457 = vst.msk [vmem:[#allocation8] sm:$0x3] %vm391, %v455
    // Predicated region
    $region18: #{tpu_custom_call.1} parent=1 // pred_check
      _
    $region19: #{tpu_custom_call.1} parent=1 // pred_check_branch
      %459 = sbr.rel (0) target = $region21
    $region20: #{tpu_custom_call.1} parent=1 // pred_region
      %s461 = ssub.s32 32, 32
      %462 = vsyncadd [#allocation4], %s461
      %s464 = sshll.u32 [#allocation7], 4
      %s465 = int_to_ptr.vmem [resolvable:$true] %s464
      %467 = dma.vmem_to_hbm [thread:$0]  %s465, 32, %s2, [#allocation4]
    $region21: #{tpu_custom_call.1} parent=1 // pred_fallthru
      _
    // Predicated region
    $region22: #{tpu_custom_call.1} parent=1 // pred_check
      _
    $region23: #{tpu_custom_call.1} parent=1 // pred_check_branch
      %469 = sbr.rel (0) target = $region25
    $region24: #{tpu_custom_call.1} parent=1 // pred_region
      %s471 = ssub.s32 32, 32
      %472 = vsyncadd [#allocation9], %s471
      %s474 = sshll.u32 [#allocation8], 4
      %s475 = int_to_ptr.vmem [resolvable:$true] %s474
      %477 = dma.vmem_to_hbm [thread:$0]  %s475, 32, %s3, [#allocation9]
    $region25: #{tpu_custom_call.1} parent=1 // pred_fallthru
      _
    // Predicated region
    $region26: #{tpu_custom_call.1} parent=1 // pred_check
      _
    $region27: #{tpu_custom_call.1} parent=1 // pred_check_branch
      %479 = sbr.rel (0) target = $region29
    $region28: #{tpu_custom_call.1} parent=1 // pred_region
      %480 = dma.done [#allocation4], 32
    $region29: #{tpu_custom_call.1} parent=1 // pred_fallthru
      _
    // Predicated region
    $region30: #{tpu_custom_call.1} parent=1 // pred_check
      _
    $region31: #{tpu_custom_call.1} parent=1 // pred_check_branch
      %482 = sbr.rel (0) target = $region33
    $region32: #{tpu_custom_call.1} parent=1 // pred_region
      %483 = dma.done [#allocation9], 32
    $region33: #{tpu_custom_call.1} parent=1 // pred_fallthru
      _
    %484 = vsyncpa [#allocation3], 1
    %485 = vsyncpa [#allocation6], 1
    %486 = vsyncpa [#allocation4], 1
    %487 = vsyncpa [#allocation9], 1

</llo_original>
